<compile_context>
chip_gen: v6e
topology: v6e:2x2x1
jax: 0.10.0
libtpu: 0.0.40
codegen_flags: <defaults>
</compile_context>

<pallas_src>
import functools

import jax
import jax.numpy as jnp
from jax.experimental import pallas as pl
from jax.experimental.pallas import tpu as pltpu


def _round_up(x, m):
    return (x + m - 1) // m * m


# ----------------------------------------------------------------------------
# Fused kernel:  LeakyReLU( LeakyReLU(x @ W1 + b1) @ W2 + b2 )
# Param slab row layout (lane width W, all offsets multiples of 8):
#   [0           : IN        ]  W1  (IN, W)   columns >= latent are zero
#   [IN          : IN+8      ]  b1  row IN only (lanes >= latent are zero)
#   [IN+8        : IN+8+W    ]  W2  (W, W)    rows >= latent, cols >= IN zero
#   [IN+8+W      : IN+16+W   ]  b2  row IN+8+W only (lanes >= IN are zero)
# ----------------------------------------------------------------------------
def _fused_fc_kernel(x_ref, p_ref, o_ref, *, alpha, in_features, lane_w):
    IN, W = in_features, lane_w

    x = x_ref[...]                              # (B, IN) f32
    w1 = p_ref[0:IN, :]                         # (IN, W)
    b1 = p_ref[IN:IN + 1, :]                    # (1, W)
    w2 = p_ref[IN + 8:IN + 8 + W, :]            # (W, W)
    b2 = p_ref[IN + 8 + W:IN + 9 + W, :]        # (1, W)

    # fc1 + LeakyReLU (f32 MXU operands, f32 accumulate / epilogue).
    h = jnp.dot(x, w1, preferred_element_type=jnp.float32) + b1
    h = jnp.where(h >= 0, h, alpha * h)

    # fc2 + LeakyReLU; intermediate h never leaves VMEM.
    y = jnp.dot(h, w2, preferred_element_type=jnp.float32) + b2
    y = jnp.where(y >= 0, y, alpha * y)

    if W > IN:                                  # static slice (only if padded)
        y = y[:, :IN]
    o_ref[...] = y.astype(o_ref.dtype)          # lane-dense (B, IN) store


# ----------------------------------------------------------------------------
# Wrapper: flatten -> fused gridless kernel -> unflatten
# ----------------------------------------------------------------------------
def fully_connected_forward(x, param_slab, alpha):
    """x: (B, C, H, W) f32.  Returns unflatten(act(fc2(act(fc1(flatten(x))))))."""
    B = x.shape[0]
    conv_2_shape = x.shape[1:]
    in_features = conv_2_shape[0] * conv_2_shape[1] * conv_2_shape[2]
    lane_w = param_slab.shape[1]
    assert param_slab.shape[0] == in_features + 16 + lane_w

    flat = x.reshape(B, in_features)            # nn.Flatten (contiguous, free)

    vmem = pl.BlockSpec(memory_space=pltpu.MemorySpace.VMEM)
    out = pl.pallas_call(
        functools.partial(_fused_fc_kernel, alpha=alpha,
                          in_features=in_features, lane_w=lane_w),
        out_shape=jax.ShapeDtypeStruct((B, in_features), jnp.float32),
        in_specs=[vmem, vmem],                  # x, packed params (no grid)
        out_specs=vmem,
    )(flat, param_slab)

    return out.reshape((B,) + tuple(conv_2_shape))   # nn.Unflatten(1, conv_2_shape)


# ----------------------------------------------------------------------------
# Parameter init (PyTorch nn.Linear layout) + one-time layout prep
# ----------------------------------------------------------------------------
def init_params(key, in_features, latent_size):
    ks = jax.random.split(key, 4)

    def u(kk, shape, fan_in):
        bound = 1.0 / jnp.sqrt(fan_in)
        return jax.random.uniform(kk, shape, jnp.float32, -bound, bound)

    return {
        # Linear(in_features, latent): PyTorch weight layout (out, in)
        "fc1_w": u(ks[0], (latent_size, in_features), in_features),
        "fc1_b": u(ks[1], (latent_size,), in_features),
        # Linear(latent, in_features)
        "fc2_w": u(ks[2], (in_features, latent_size), latent_size),
        "fc2_b": u(ks[3], (in_features,), latent_size),
    }


def prep_params(params, in_features, latent_size):
    """Pack all FC params into one lane-dense f32 slab (done once, outside jit).

    Pre-transposes to (K, N), zero-pads the latent dim to a 128-lane multiple,
    and stacks [W1; b1; W2; b2] along rows so the kernel needs a single DMA.
    """
    IN = in_features
    assert IN % 8 == 0, "in_features must be a multiple of 8 for slab packing"
    W = _round_up(max(IN, latent_size), 128)    # common lane width

    w1 = params["fc1_w"].T.astype(jnp.float32)  # (IN, latent)
    b1 = params["fc1_b"].astype(jnp.float32)    # (latent,)
    w2 = params["fc2_w"].T.astype(jnp.float32)  # (latent, IN)
    b2 = params["fc2_b"].astype(jnp.float32)    # (IN,)

    w1_pad = jnp.zeros((IN, W), jnp.float32).at[:, :latent_size].set(w1)
    b1_pad = jnp.zeros((8, W), jnp.float32).at[0, :latent_size].set(b1)
    w2_pad = jnp.zeros((W, W), jnp.float32).at[:latent_size, :IN].set(w2)
    b2_pad = jnp.zeros((8, W), jnp.float32).at[0, :IN].set(b2)

    return jnp.concatenate([w1_pad, b1_pad, w2_pad, b2_pad], axis=0)  # (IN+16+W, W)


# ----------------------------------------------------------------------------
# Pure-JAX f32 reference (mirrors the PyTorch module exactly)
# ----------------------------------------------------------------------------
def fully_connected_ref(x, params, alpha):
    B = x.shape[0]
    shape = x.shape[1:]
    f = x.reshape(B, -1)

    def lin_act(v, w, b):
        y = v @ w.T + b
        return jnp.where(y >= 0, y, alpha * y)

    h = lin_act(f, params["fc1_w"], params["fc1_b"])
    y = lin_act(h, params["fc2_w"], params["fc2_b"])
    return y.reshape((B,) + tuple(shape))


if __name__ == "__main__":
    # Shapes consistent with the CAE: img_size=16, kernel_size=2, num_kernels=4,
    # latent_size=32 -> conv_2_shape=(8, 4, 4), in_features=128.  Batch = 2.
    conv_2_shape = (8, 4, 4)
    in_features = conv_2_shape[0] * conv_2_shape[1] * conv_2_shape[2]   # 128
    latent_size = 32
    alpha = 0.01
    batch = 2

    key = jax.random.PRNGKey(0)
    kx, kp = jax.random.split(key)
    x = jax.random.normal(kx, (batch,) + conv_2_shape, jnp.float32)
    params = init_params(kp, in_features, latent_size)
    param_slab = prep_params(params, in_features, latent_size)

    fwd = jax.jit(functools.partial(fully_connected_forward, alpha=alpha))
    out = fwd(x, param_slab)
    out = jax.block_until_ready(out)

    ref = fully_connected_ref(x, params, alpha)
    assert out.shape == (batch,) + conv_2_shape, out.shape
    # Full f32 path now -> tight tolerance.
    assert jnp.allclose(out, ref, atol=2e-3, rtol=2e-3), float(
        jnp.max(jnp.abs(out - ref))
    )

    print("KERNEL_OK")
</pallas_src>

<mosaic_0001>
module attributes {stable_mosaic.version = 11 : i64} {
  func.func @_fused_fc_kernel(%arg0: memref<2x128xf32, #tpu.memory_space<vmem>>, %arg1: memref<272x128xf32, #tpu.memory_space<vmem>>, %arg2: memref<2x128xf32, #tpu.memory_space<vmem>>) attributes {dimension_semantics = [], scalar_prefetch = 0 : i64, scratch_operands = 0 : i64, tpu.core_type = #tpu.core_type<tc>} {
    %c0 = arith.constant 0 : index
    %c0_0 = arith.constant 0 : index
    %0 = vector.load %arg0[%c0, %c0_0] : memref<2x128xf32, #tpu.memory_space<vmem>>, vector<2x128xf32>
    %c0_1 = arith.constant 0 : index
    %c0_2 = arith.constant 0 : index
    %1 = vector.load %arg1[%c0_1, %c0_2] : memref<272x128xf32, #tpu.memory_space<vmem>>, vector<128x128xf32>
    %c128 = arith.constant 128 : index
    %c0_3 = arith.constant 0 : index
    %2 = vector.load %arg1[%c128, %c0_3] : memref<272x128xf32, #tpu.memory_space<vmem>>, vector<1x128xf32>
    %c136 = arith.constant 136 : index
    %c0_4 = arith.constant 0 : index
    %3 = vector.load %arg1[%c136, %c0_4] : memref<272x128xf32, #tpu.memory_space<vmem>>, vector<128x128xf32>
    %c264 = arith.constant 264 : index
    %c0_5 = arith.constant 0 : index
    %4 = vector.load %arg1[%c264, %c0_5] : memref<272x128xf32, #tpu.memory_space<vmem>>, vector<1x128xf32>
    %cst = arith.constant dense<0.000000e+00> : vector<2x128xf32>
    %5 = tpu.matmul %0, %1, %cst {dimension_numbers = #tpu.dot_dimension_numbers<[1], [0], [0], [1], [0, 0, 1, 1], [], []>} : vector<2x128xf32>, vector<128x128xf32>, vector<2x128xf32> -> vector<2x128xf32>
    %6 = vector.broadcast %2 : vector<1x128xf32> to vector<2x128xf32>
    %7 = arith.addf %5, %6 : vector<2x128xf32>
    %cst_6 = arith.constant 0.000000e+00 : f32
    %8 = vector.broadcast %cst_6 : f32 to vector<2x128xf32>
    %9 = arith.cmpf oge, %7, %8 : vector<2x128xf32>
    %cst_7 = arith.constant 0.00999999977 : f32
    %10 = vector.broadcast %cst_7 : f32 to vector<2x128xf32>
    %11 = arith.mulf %10, %7 : vector<2x128xf32>
    %12 = arith.select %9, %7, %11 : vector<2x128xi1>, vector<2x128xf32>
    %cst_8 = arith.constant dense<0.000000e+00> : vector<2x128xf32>
    %13 = tpu.matmul %12, %3, %cst_8 {dimension_numbers = #tpu.dot_dimension_numbers<[1], [0], [0], [1], [0, 0, 1, 1], [], []>} : vector<2x128xf32>, vector<128x128xf32>, vector<2x128xf32> -> vector<2x128xf32>
    %14 = vector.broadcast %4 : vector<1x128xf32> to vector<2x128xf32>
    %15 = arith.addf %13, %14 : vector<2x128xf32>
    %cst_9 = arith.constant 0.000000e+00 : f32
    %16 = vector.broadcast %cst_9 : f32 to vector<2x128xf32>
    %17 = arith.cmpf oge, %15, %16 : vector<2x128xf32>
    %cst_10 = arith.constant 0.00999999977 : f32
    %18 = vector.broadcast %cst_10 : f32 to vector<2x128xf32>
    %19 = arith.mulf %18, %15 : vector<2x128xf32>
    %20 = arith.select %17, %15, %19 : vector<2x128xi1>, vector<2x128xf32>
    %c0_11 = arith.constant 0 : index
    %c0_12 = arith.constant 0 : index
    %21 = vector.load %arg2[%c0_11, %c0_12] : memref<2x128xf32, #tpu.memory_space<vmem>>, vector<2x128xf32>
    tpu.vector_store %arg2[%c0_11, %c0_12], %20 {strides = array<i32>} : memref<2x128xf32, #tpu.memory_space<vmem>>, vector<2x128xf32>,
    return
  }
}

</mosaic_0001>

<llo_original>
// kernel: fully_connected_forward.1
$region0: #{fully_connected_forward.1}
  #allocation0 [shape = 'u32[]', space=smem, size = 0x4, offset = 0x4, fixed_abs, tag = 'smem constant byte address 0x4 - core index']
  #allocation1 [shape = 'u32[144,128]{1,0:T(1,128)}', space=vmem, size = 0x12000, scoped, tag = 'internal scratch']
  %s0 = inlined_call_operand.vmem [shape: f32[2,128], index: 0, kind: input, shape index: {}]
  %s1 = inlined_call_operand.hbm [shape: f32[272,128], index: 1, kind: input, shape index: {}]
  %s2 = inlined_call_operand.vmem [shape: f32[2,128], index: 2, kind: output, shape index: {}]
  %s3 = sld [smem:[#allocation0]]
  $region22: #{fully_connected_forward.1} parent=0
    _
  %s5 = ssub.s32 1, %s3
  %s6 = scalar_select 0, %s5, %s3
  $region1: #{fully_connected_forward.1} parent=0
    #allocation2 [shape = 'u8[139264]{0}', space=vmem, size = 0x22000, scoped, tag = 'input window, operand 1, single buffered']
    #allocation3 [shape = 's32[1]{0}', space=sflag, size = 0x4, scoped, tag = 'scoped memory for fully_connected_forward.1']
    %7 = vsyncpa [#allocation3], 0
    // Predicated region
    $region2: #{fully_connected_forward.1} parent=1 // pred_check
      _
    $region3: #{fully_connected_forward.1} parent=1 // pred_check_branch
      %9 = sbr.rel (0) target = $region5
    $region4: #{fully_connected_forward.1} parent=1 // pred_region
      _
    $region5: #{fully_connected_forward.1} parent=1 // pred_fallthru
      _
    // Predicated region
    $region6: #{fully_connected_forward.1} parent=1 // pred_check
      _
    $region7: #{fully_connected_forward.1} parent=1 // pred_check_branch
      %11 = sbr.rel (0) target = $region9
    $region8: #{fully_connected_forward.1} parent=1 // pred_region
      %s13 = ssub.s32 4352, 4352
      %14 = vsyncadd [#allocation3], %s13
      %s15 = sshll.u32 [#allocation2], 4
      %s16 = int_to_ptr.vmem [resolvable:$true] %s15
      %21 = dma.hbm_to_vmem [thread:$0]  %s1, 4352, %s16, [#allocation3], 128, 128, 8
    $region9: #{fully_connected_forward.1} parent=1 // pred_fallthru
      _
    // Predicated region
    $region10: #{fully_connected_forward.1} parent=1 // pred_check
      _
    $region11: #{fully_connected_forward.1} parent=1 // pred_check_branch
      %23 = sbr.rel (0) target = $region13
    $region12: #{fully_connected_forward.1} parent=1 // pred_region
      %24 = dma.done [#allocation3], 4352
    $region13: #{fully_connected_forward.1} parent=1 // pred_fallthru
      _
    %v25 = vld [vmem:[%s0] sm:$0x3]
    %v26 = vld [vmem:[#allocation2] sm:$0xff]
    %v27 = vld [vmem:[#allocation2 + $0x8] sm:$0xff]
    %v28 = vld [vmem:[#allocation2 + $0x10] sm:$0xff]
    %v29 = vld [vmem:[#allocation2 + $0x18] sm:$0xff]
    %v30 = vld [vmem:[#allocation2 + $0x20] sm:$0xff]
    %v31 = vld [vmem:[#allocation2 + $0x28] sm:$0xff]
    %v32 = vld [vmem:[#allocation2 + $0x30] sm:$0xff]
    %v33 = vld [vmem:[#allocation2 + $0x38] sm:$0xff]
    %v34 = vld [vmem:[#allocation2 + $0x40] sm:$0xff]
    %v35 = vld [vmem:[#allocation2 + $0x48] sm:$0xff]
    %v36 = vld [vmem:[#allocation2 + $0x50] sm:$0xff]
    %v37 = vld [vmem:[#allocation2 + $0x58] sm:$0xff]
    %v38 = vld [vmem:[#allocation2 + $0x60] sm:$0xff]
    %v39 = vld [vmem:[#allocation2 + $0x68] sm:$0xff]
    %v40 = vld [vmem:[#allocation2 + $0x70] sm:$0xff]
    %v41 = vld [vmem:[#allocation2 + $0x78] sm:$0xff]
    %v42 = vld [vmem:[#allocation2 + $0x80] sm:$0x1]
    %v43 = vld [vmem:[#allocation2 + $0x88] sm:$0xff]
    %v44 = vld [vmem:[#allocation2 + $0x90] sm:$0xff]
    %v45 = vld [vmem:[#allocation2 + $0x98] sm:$0xff]
    %v46 = vld [vmem:[#allocation2 + $0xa0] sm:$0xff]
    %v47 = vld [vmem:[#allocation2 + $0xa8] sm:$0xff]
    %v48 = vld [vmem:[#allocation2 + $0xb0] sm:$0xff]
    %v49 = vld [vmem:[#allocation2 + $0xb8] sm:$0xff]
    %v50 = vld [vmem:[#allocation2 + $0xc0] sm:$0xff]
    %v51 = vld [vmem:[#allocation2 + $0xc8] sm:$0xff]
    %v52 = vld [vmem:[#allocation2 + $0xd0] sm:$0xff]
    %v53 = vld [vmem:[#allocation2 + $0xd8] sm:$0xff]
    %v54 = vld [vmem:[#allocation2 + $0xe0] sm:$0xff]
    %v55 = vld [vmem:[#allocation2 + $0xe8] sm:$0xff]
    %v56 = vld [vmem:[#allocation2 + $0xf0] sm:$0xff]
    %v57 = vld [vmem:[#allocation2 + $0xf8] sm:$0xff]
    %v58 = vld [vmem:[#allocation2 + $0x100] sm:$0xff]
    %v59 = vld [vmem:[#allocation2 + $0x108] sm:$0x1]
    %v60 = vlaneseq
    %v61 = vshrl.u32 %v60, 7
    %v62 = vsub.s32 0, %v61
    %v63 = vrot.slane %v42, %v62
    %64 = vmatprep.subr.mxu0 0.0
    %65 = vmatpush1.msra.mxu0 %v41
    %66 = vmatprep.subr.mxu0 0.0
    %67 = vmatpush1.msra.mxu0 %v40
    %68 = vmatprep.subr.mxu0 0.0
    %69 = vmatpush1.msra.mxu0 %v39
    %70 = vmatprep.subr.mxu0 0.0
    %71 = vmatpush1.msra.mxu0 %v38
    %72 = vmatprep.subr.mxu0 0.0
    %73 = vmatpush1.msra.mxu0 %v37
    %74 = vmatprep.subr.mxu0 0.0
    %75 = vmatpush1.msra.mxu0 %v36
    %76 = vmatprep.subr.mxu0 0.0
    %77 = vmatpush1.msra.mxu0 %v35
    %78 = vmatprep.subr.mxu0 0.0
    %79 = vmatpush1.msra.mxu0 %v34
    %80 = vmatprep.subr.mxu0 0.0
    %81 = vmatpush1.msra.mxu0 %v33
    %82 = vmatprep.subr.mxu0 0.0
    %83 = vmatpush1.msra.mxu0 %v32
    %84 = vmatprep.subr.mxu0 0.0
    %85 = vmatpush1.msra.mxu0 %v31
    %86 = vmatprep.subr.mxu0 0.0
    %87 = vmatpush1.msra.mxu0 %v30
    %88 = vmatprep.subr.mxu0 0.0
    %89 = vmatpush1.msra.mxu0 %v29
    %90 = vmatprep.subr.mxu0 0.0
    %91 = vmatpush1.msra.mxu0 %v28
    %92 = vmatprep.subr.mxu0 0.0
    %93 = vmatpush1.msra.mxu0 %v27
    %94 = vmatprep.subr.mxu0 0.0
    %95 = vmatpush1.msra.mxu0 %v26
    %96 = vmatprep.subr.mxu0 0.0
    %97 = vmatpush2.msra.mxu0 0.0
    %98 = vmatprep.subr.mxu0 0.0
    %99 = vmatpush2.msra.mxu0 0.0
    %100 = vmatprep.subr.mxu0 0.0
    %101 = vmatpush2.msra.mxu0 0.0
    %102 = vmatprep.subr.mxu0 0.0
    %103 = vmatpush2.msra.mxu0 0.0
    %104 = vmatprep.subr.mxu0 0.0
    %105 = vmatpush2.msra.mxu0 0.0
    %106 = vmatprep.subr.mxu0 0.0
    %107 = vmatpush2.msra.mxu0 0.0
    %108 = vmatprep.subr.mxu0 0.0
    %109 = vmatpush2.msra.mxu0 0.0
    %110 = vmatprep.subr.mxu0 0.0
    %111 = vmatpush2.msra.mxu0 0.0
    %112 = vmatprep.subr.mxu0 0.0
    %113 = vmatpush2.msra.mxu0 0.0
    %114 = vmatprep.subr.mxu0 0.0
    %115 = vmatpush2.msra.mxu0 0.0
    %116 = vmatprep.subr.mxu0 0.0
    %117 = vmatpush2.msra.mxu0 0.0
    %118 = vmatprep.subr.mxu0 0.0
    %119 = vmatpush2.msra.mxu0 0.0
    %120 = vmatprep.subr.mxu0 0.0
    %121 = vmatpush2.msra.mxu0 0.0
    %122 = vmatprep.subr.mxu0 0.0
    %123 = vmatpush2.msra.mxu0 0.0
    %124 = vmatprep.subr.mxu0 0.0
    %125 = vmatpush2.msra.mxu0 0.0
    %126 = vmatprep.subr.mxu0 0.0
    %127 = vmatpush2.msra.mxu0 0.0
    %128 = vmatprep.mubr.f32.mxu0 0.0
    %129 = vmatmul.mubr.f32.gmra.mxu0 %v25
    %v130 = vpop.f32.mrf.mxu0
    %v131 = vadd.f32 %v63, %v130
    %v132 = vpop.f32.mrf.mxu0
    %133 = vdwg.mxu0
    %vm134 = vcmp.ge.f32.partialorder %v131, 0.0
    %v135 = vmul.f32 %v131, 0.01
    %v136 = vsel %vm134, %v131, %v135
    %v137 = vlaneseq
    %v138 = vshrl.u32 %v137, 7
    %v139 = vsub.s32 0, %v138
    %v140 = vrot.slane %v59, %v139
    %141 = vmatprep.subr.mxu0 0.0
    %142 = vmatpush1.msra.mxu0 %v58
    %143 = vmatprep.subr.mxu0 0.0
    %144 = vmatpush1.msra.mxu0 %v57
    %145 = vmatprep.subr.mxu0 0.0
    %146 = vmatpush1.msra.mxu0 %v56
    %147 = vmatprep.subr.mxu0 0.0
    %148 = vmatpush1.msra.mxu0 %v55
    %149 = vmatprep.subr.mxu0 0.0
    %150 = vmatpush1.msra.mxu0 %v54
    %151 = vmatprep.subr.mxu0 0.0
    %152 = vmatpush1.msra.mxu0 %v53
    %153 = vmatprep.subr.mxu0 0.0
    %154 = vmatpush1.msra.mxu0 %v52
    %155 = vmatprep.subr.mxu0 0.0
    %156 = vmatpush1.msra.mxu0 %v51
    %157 = vmatprep.subr.mxu0 0.0
    %158 = vmatpush1.msra.mxu0 %v50
    %159 = vmatprep.subr.mxu0 0.0
    %160 = vmatpush1.msra.mxu0 %v49
    %161 = vmatprep.subr.mxu0 0.0
    %162 = vmatpush1.msra.mxu0 %v48
    %163 = vmatprep.subr.mxu0 0.0
    %164 = vmatpush1.msra.mxu0 %v47
    %165 = vmatprep.subr.mxu0 0.0
    %166 = vmatpush1.msra.mxu0 %v46
    %167 = vmatprep.subr.mxu0 0.0
    %168 = vmatpush1.msra.mxu0 %v45
    %169 = vmatprep.subr.mxu0 0.0
    %170 = vmatpush1.msra.mxu0 %v44
    %171 = vmatprep.subr.mxu0 0.0
    %172 = vmatpush1.msra.mxu0 %v43
    %173 = vmatprep.subr.mxu0 0.0
    %174 = vmatpush2.msra.mxu0 0.0
    %175 = vmatprep.subr.mxu0 0.0
    %176 = vmatpush2.msra.mxu0 0.0
    %177 = vmatprep.subr.mxu0 0.0
    %178 = vmatpush2.msra.mxu0 0.0
    %179 = vmatprep.subr.mxu0 0.0
    %180 = vmatpush2.msra.mxu0 0.0
    %181 = vmatprep.subr.mxu0 0.0
    %182 = vmatpush2.msra.mxu0 0.0
    %183 = vmatprep.subr.mxu0 0.0
    %184 = vmatpush2.msra.mxu0 0.0
    %185 = vmatprep.subr.mxu0 0.0
    %186 = vmatpush2.msra.mxu0 0.0
    %187 = vmatprep.subr.mxu0 0.0
    %188 = vmatpush2.msra.mxu0 0.0
    %189 = vmatprep.subr.mxu0 0.0
    %190 = vmatpush2.msra.mxu0 0.0
    %191 = vmatprep.subr.mxu0 0.0
    %192 = vmatpush2.msra.mxu0 0.0
    %193 = vmatprep.subr.mxu0 0.0
    %194 = vmatpush2.msra.mxu0 0.0
    %195 = vmatprep.subr.mxu0 0.0
    %196 = vmatpush2.msra.mxu0 0.0
    %197 = vmatprep.subr.mxu0 0.0
    %198 = vmatpush2.msra.mxu0 0.0
    %199 = vmatprep.subr.mxu0 0.0
    %200 = vmatpush2.msra.mxu0 0.0
    %201 = vmatprep.subr.mxu0 0.0
    %202 = vmatpush2.msra.mxu0 0.0
    %203 = vmatprep.subr.mxu0 0.0
    %204 = vmatpush2.msra.mxu0 0.0
    %205 = vmatprep.mubr.f32.mxu0 0.0
    %206 = vmatmul.mubr.f32.gmra.mxu0 %v136
    %v207 = vpop.f32.mrf.mxu0
    %v208 = vadd.f32 %v140, %v207
    %v209 = vpop.f32.mrf.mxu0
    %210 = vdwg.mxu0
    %vm211 = vcmp.ge.f32.partialorder %v208, 0.0
    %v212 = vmul.f32 %v208, 0.01
    %v213 = vsel %vm211, %v208, %v212
    %214 = vst [vmem:[%s2] sm:$0x3] %v213
    // Predicated region
    $region14: #{fully_connected_forward.1} parent=1 // pred_check
      _
    $region15: #{fully_connected_forward.1} parent=1 // pred_check_branch
      %216 = sbr.rel (0) target = $region17
    $region16: #{fully_connected_forward.1} parent=1 // pred_region
      _
    $region17: #{fully_connected_forward.1} parent=1 // pred_fallthru
      _
    // Predicated region
    $region18: #{fully_connected_forward.1} parent=1 // pred_check
      _
    $region19: #{fully_connected_forward.1} parent=1 // pred_check_branch
      %218 = sbr.rel (0) target = $region21
    $region20: #{fully_connected_forward.1} parent=1 // pred_region
      _
    $region21: #{fully_connected_forward.1} parent=1 // pred_fallthru
      _
    %219 = vsyncpa [#allocation3], 1

</llo_original>
